<compile_context>
chip_gen: v5e
topology: v5e:2x2
jax: 0.10.0
libtpu: 0.0.40
codegen_flags: <defaults>
</compile_context>

<pallas_src>
import functools

import jax
import jax.numpy as jnp
from jax.experimental import pallas as pl
from jax.experimental.pallas import tpu as pltpu

LANES = 128
SUBLANES = 8
# ~4 MiB per (input, buffer) block: keeps the kernel DMA-bound and amortizes
# per-grid-step overhead on v6e/v7x.  2 inputs x 2 buffers x 4 MiB = 16 MiB
# resident, covered by the explicit vmem_limit_bytes below (v5e scoped default
# is only 16 MiB; physical VMEM is far larger on all generations).
TARGET_BLOCK_BYTES = 4 << 20


def _cdiv(a, b):
    return -(-a // b)


def _packed_sublanes(itemsize):
    # f32 -> 8 rows per vreg, bf16/f16 -> 16, int8/fp8 -> 32.
    return max(SUBLANES, 32 // max(1, int(itemsize)))


def _dice_kernel(x_ref, t_ref, o_ref, *, total_rows, block_rows, steps,
                 may_be_partial):
    """Accumulate [sum(s*t), sum(t*t), sum(s*s)] into o_ref (3, 8, 128)."""
    p = pl.program_id(0)   # parallel partition (v7x 2nd TensorCore)
    j = pl.program_id(1)   # sequential reduction step within the partition

    @pl.when(j == 0)
    def _():
        o_ref[...] = jnp.zeros_like(o_ref)

    x = x_ref[...].astype(jnp.float32)   # in-kernel cast (free vs. DMA)
    t = t_ref[...].astype(jnp.float32)

    def accumulate(s, tv):
        # (block_rows, 128) -> (block_rows//8, 8, 128); the axis-0 sum is pure
        # elementwise vreg adds on the VPU (no cross-lane XLU in the hot loop).
        # TODO(synk): on v7x with bf16 inputs, push this reduction onto the
        # idle MXU (ones-vector matmul) if profiling shows the VPU co-limiting.
        o_ref[0] += (s * tv).reshape(-1, SUBLANES, LANES).sum(axis=0)
        o_ref[1] += (tv * tv).reshape(-1, SUBLANES, LANES).sum(axis=0)
        o_ref[2] += (s * s).reshape(-1, SUBLANES, LANES).sum(axis=0)

    if not may_be_partial:
        # Static fast path: every block is entirely valid -> no masking at all.
        accumulate(jax.nn.sigmoid(x), t)
    else:
        row0 = (p * steps + j) * block_rows
        fully_valid = row0 + block_rows <= total_rows

        @pl.when(fully_valid)
        def _():
            accumulate(jax.nn.sigmoid(x), t)

        @pl.when(jnp.logical_not(fully_valid))
        def _():
            # Ragged last block / clamped dead block: mask invalid rows
            # (where-select is NaN-safe for garbage in the OOB region).
            rid = jax.lax.broadcasted_iota(jnp.int32, (block_rows, LANES), 0)
            mask = (rid + row0) < total_rows
            s = jnp.where(mask, jax.nn.sigmoid(x), 0.0)
            tv = jnp.where(mask, t, 0.0)
            accumulate(s, tv)


def _dice_sums_2d(x2d, t2d, max_tile_rows=None):
    """Pallas streaming reduction over lane-dense (rows, 128) slabs -> (3,) f32."""
    rows = x2d.shape[0]
    isize_x = jnp.dtype(x2d.dtype).itemsize
    isize_t = jnp.dtype(t2d.dtype).itemsize
    pack = _packed_sublanes(min(isize_x, isize_t))

    if max_tile_rows is None:
        max_tile_rows = TARGET_BLOCK_BYTES // (LANES * max(isize_x, isize_t))

    block_rows = min(int(max_tile_rows), rows)
    if block_rows < rows:
        # Non-full blocks must respect the packed (sublanes, 128) tile.
        block_rows = max(pack, (block_rows // pack) * pack)

    num_blocks = _cdiv(rows, block_rows)
    # 2-way split feeds v7x's two TensorCores (harmless elsewhere).  Only
    # accept a clamped (fully-masked, redundant-DMA) dead block when it is a
    # small fraction of total traffic; otherwise stay single-partition.
    if num_blocks >= 2 and num_blocks % 2 == 0:
        num_parts = 2
    elif num_blocks >= 8:
        num_parts = 2
    else:
        num_parts = 1
    steps = _cdiv(num_blocks, num_parts)
    may_be_partial = num_parts * steps * block_rows > rows

    if num_parts * steps == num_blocks:
        in_idx = lambda p, j: (p * steps + j, 0)
    else:
        # Last partition has out-of-range steps; clamp their DMA source.  The
        # kernel masks every row with global index >= rows, so data there is
        # irrelevant (static proof: clamped block's row0 >= rows).
        in_idx = lambda p, j: (jnp.minimum(p * steps + j, num_blocks - 1), 0)

    kernel = functools.partial(
        _dice_kernel, total_rows=rows, block_rows=block_rows, steps=steps,
        may_be_partial=may_be_partial)

    # 2 buffers per input + small output / internal scratch headroom.
    vmem_limit = 2 * block_rows * LANES * (isize_x + isize_t) + (4 << 20)
    vmem_limit = max(vmem_limit, 16 << 20)

    partials = pl.pallas_call(
        kernel,
        out_shape=jax.ShapeDtypeStruct((num_parts, 3, SUBLANES, LANES),
                                       jnp.float32),
        grid_spec=pltpu.PrefetchScalarGridSpec(
            num_scalar_prefetch=0,
            grid=(num_parts, steps),
            in_specs=[
                pl.BlockSpec((block_rows, LANES), in_idx),
                pl.BlockSpec((block_rows, LANES), in_idx),
            ],
            out_specs=pl.BlockSpec((None, 3, SUBLANES, LANES),
                                   lambda p, j: (p, 0, 0, 0)),
        ),
        compiler_params=pltpu.CompilerParams(
            dimension_semantics=("parallel", "arbitrary"),
            vmem_limit_bytes=int(vmem_limit),
        ),
    )(x2d, t2d)
    return jnp.sum(partials, axis=(0, 2, 3))    # (3,) — tiny XLA reduction


def _sums_small(x, t):
    """Plain-JAX partial sums for tiny ragged tails (< a few KiB)."""
    s = jax.nn.sigmoid(x.astype(jnp.float32))
    tv = t.astype(jnp.float32)
    return jnp.stack([jnp.sum(s * tv), jnp.sum(tv * tv), jnp.sum(s * s)])


@functools.partial(jax.jit, static_argnames=("softmax", "max_tile_rows"))
def dice_loss(inputs, target, softmax=False, max_tile_rows=None):
    """Pallas DiceLoss.forward (torch `weight` arg is unused in the forward)."""
    assert inputs.shape == target.shape, (
        f"predict {inputs.shape} & target {target.shape} shape do not match")
    if softmax:
        # Channel axis = 1 (NCHW), as torch.softmax(inputs, dim=1).  Keep the
        # result in the input's native dtype so the extra HBM round trip is
        # not an implicitly-upcast f32 copy for bf16 inputs.
        # TODO(synk): fuse the channel softmax into the Pallas kernel (tile
        # with C resident) to remove this extra full-array HBM round trip.
        inputs = jax.nn.softmax(inputs, axis=1).astype(inputs.dtype)

    n = inputs.size
    pack = _packed_sublanes(min(jnp.dtype(inputs.dtype).itemsize,
                                jnp.dtype(target.dtype).itemsize))
    align = pack * LANES

    sums = jnp.zeros((3,), jnp.float32)
    if n % align == 0 and n > 0:
        # Zero-copy path: reshape of the full array is a layout bitcast.
        x2d = inputs.reshape(n // LANES, LANES)
        t2d = target.reshape(n // LANES, LANES)
        sums = sums + _dice_sums_2d(x2d, t2d, max_tile_rows)
    else:
        # Tile-unaligned numel: run the aligned prefix through the kernel and
        # reduce the (< align element) remainder in plain JAX — no jnp.pad
        # copy of the whole input.
        # TODO(synk): make the prefix fully zero-copy too (pl.ANY + manual
        # DMA); XLA still materializes the prefix slice feeding the kernel.
        n_main = (n // align) * align
        flat_x = inputs.reshape(-1)
        flat_t = target.reshape(-1)
        if n_main > 0:
            x2d = flat_x[:n_main].reshape(n_main // LANES, LANES)
            t2d = flat_t[:n_main].reshape(n_main // LANES, LANES)
            sums = sums + _dice_sums_2d(x2d, t2d, max_tile_rows)
        if n_main < n:
            sums = sums + _sums_small(flat_x[n_main:], flat_t[n_main:])

    intersect, y_sum, z_sum = sums[0], sums[1], sums[2]
    smooth = jnp.float32(1e-5)
    return 1.0 - (2.0 * intersect + smooth) / (z_sum + y_sum + smooth)


def _dice_loss_ref(inputs, target, softmax=False):
    """Pure-JAX reference mirroring the PyTorch forward."""
    if softmax:
        inputs = jax.nn.softmax(inputs, axis=1)
    s = jax.nn.sigmoid(inputs.astype(jnp.float32))
    t = target.astype(jnp.float32)
    smooth = 1e-5
    intersect = jnp.sum(s * t)
    y_sum = jnp.sum(t * t)
    z_sum = jnp.sum(s * s)
    return 1.0 - (2.0 * intersect + smooth) / (z_sum + y_sum + smooth)


if __name__ == "__main__":
    n_classes = 4  # DiceLoss(n_classes) — only used by the (unused) one-hot path
    N, C, H, W = 2, n_classes, 16, 16  # NCHW, matching the PyTorch module

    key = jax.random.PRNGKey(0)
    k1, k2 = jax.random.split(key)
    inputs = jax.random.normal(k1, (N, C, H, W), dtype=jnp.float32)
    # target same shape as inputs (forward asserts equal sizes); soft labels in [0,1]
    target = jax.random.uniform(k2, (N, C, H, W), dtype=jnp.float32)

    loss = jax.block_until_ready(dice_loss(inputs, target, softmax=False))
    ref = _dice_loss_ref(inputs, target, softmax=False)
    assert jnp.allclose(loss, ref, rtol=1e-5, atol=1e-5), (loss, ref)

    # softmax=True path
    loss_sm = jax.block_until_ready(dice_loss(inputs, target, softmax=True))
    ref_sm = _dice_loss_ref(inputs, target, softmax=True)
    assert jnp.allclose(loss_sm, ref_sm, rtol=1e-5, atol=1e-5), (loss_sm, ref_sm)

    # odd block count + ragged (masked) last block, single partition
    k3, k4 = jax.random.split(k1)
    x2 = jax.random.normal(k3, (1, 5, 16, 64), dtype=jnp.float32)   # 5120 elems -> rows=40
    t2 = jax.random.uniform(k4, (1, 5, 16, 64), dtype=jnp.float32)
    l2 = jax.block_until_ready(dice_loss(x2, t2, max_tile_rows=16))  # 3 blocks, last partial
    r2 = _dice_loss_ref(x2, t2)
    assert jnp.allclose(l2, r2, rtol=1e-5, atol=1e-5), (l2, r2)

    # even block count -> 2 partitions, fully unmasked hot path
    x2e = jax.random.normal(k3, (1, 4, 16, 64), dtype=jnp.float32)  # 4096 elems -> rows=32
    t2e = jax.random.uniform(k4, (1, 4, 16, 64), dtype=jnp.float32)
    l2e = jax.block_until_ready(dice_loss(x2e, t2e, max_tile_rows=8))  # 4 blocks -> parts=2
    r2e = _dice_loss_ref(x2e, t2e)
    assert jnp.allclose(l2e, r2e, rtol=1e-5, atol=1e-5), (l2e, r2e)

    # many odd blocks -> 2 partitions with one clamped (fully masked) dead block
    x2o = jax.random.normal(k4, (1, 9, 16, 64), dtype=jnp.float32)  # 9216 elems -> rows=72
    t2o = jax.random.uniform(k3, (1, 9, 16, 64), dtype=jnp.float32)
    l2o = jax.block_until_ready(dice_loss(x2o, t2o, max_tile_rows=8))  # 9 blocks -> parts=2
    r2o = _dice_loss_ref(x2o, t2o)
    assert jnp.allclose(l2o, r2o, rtol=1e-5, atol=1e-5), (l2o, r2o)

    # numel not a multiple of the packed tile: wrapper-tail path (no jnp.pad copy)
    k5, k6 = jax.random.split(k2)
    x3 = jax.random.normal(k5, (2, 3, 7, 11), dtype=jnp.float32)    # 462 elems -> tail only
    t3 = jax.random.uniform(k6, (2, 3, 7, 11), dtype=jnp.float32)
    l3 = jax.block_until_ready(dice_loss(x3, t3))
    r3 = _dice_loss_ref(x3, t3)
    assert jnp.allclose(l3, r3, rtol=1e-5, atol=1e-5), (l3, r3)

    # aligned prefix through the kernel + ragged tail in the wrapper
    x4 = jax.random.normal(k6, (3, 5, 9, 13), dtype=jnp.float32)    # 1755 elems -> 1024 + 731
    t4 = jax.random.uniform(k5, (3, 5, 9, 13), dtype=jnp.float32)
    l4 = jax.block_until_ready(dice_loss(x4, t4))
    r4 = _dice_loss_ref(x4, t4)
    assert jnp.allclose(l4, r4, rtol=1e-5, atol=1e-5), (l4, r4)

    # native bf16 inputs stay bf16 in HBM; cast to f32 happens in-kernel
    xb, tb = inputs.astype(jnp.bfloat16), target.astype(jnp.bfloat16)
    lb = jax.block_until_ready(dice_loss(xb, tb))
    rb = _dice_loss_ref(xb, tb)
    assert jnp.allclose(lb, rb, rtol=1e-3, atol=1e-3), (lb, rb)

    print("KERNEL_OK")
</pallas_src>

<mosaic_0001>
module attributes {stable_mosaic.version = 11 : i64} {
  func.func @_dice_kernel(%arg0: i32, %arg1: i32, %arg2: memref<16x128xf32, #tpu.memory_space<vmem>>, %arg3: memref<16x128xf32, #tpu.memory_space<vmem>>, %arg4: memref<1x3x8x128xf32, #tpu.memory_space<vmem>>) attributes {dimension_semantics = [#tpu.dimension_semantics<parallel>, #tpu.dimension_semantics<arbitrary>], iteration_bounds = array<i64: 1, 1>, scalar_prefetch = 0 : i64, scratch_operands = 0 : i64, tpu.core_type = #tpu.core_type<tc>, window_params = [{transform_indices = @transform_0, window_bounds = array<i64: 16, 128>}, {transform_indices = @transform_1, window_bounds = array<i64: 16, 128>}, {transform_indices = @transform_2, window_bounds = array<i64: 1, 3, 8, 128>}]} {
    %c0_i32 = arith.constant 0 : i32
    %0 = arith.cmpi eq, %arg1, %c0_i32 : i32
    %1 = arith.extui %0 : i1 to i32
    %c0_i32_0 = arith.constant 0 : i32
    %2 = arith.cmpi ne, %1, %c0_i32_0 : i32
    scf.if %2 {
      %cst_29 = arith.constant 0.000000e+00 : f32
      %37 = vector.broadcast %cst_29 : f32 to vector<3x8x128xf32>
      %c0_30 = arith.constant 0 : index
      %c0_31 = arith.constant 0 : index
      %c0_32 = arith.constant 0 : index
      %c0_33 = arith.constant 0 : index
      %38 = vector.load %arg4[%c0_30, %c0_31, %c0_32, %c0_33] : memref<1x3x8x128xf32, #tpu.memory_space<vmem>>, vector<1x3x8x128xf32>
      %39 = vector.shape_cast %38 : vector<1x3x8x128xf32> to vector<3x8x128xf32>
      %40 = vector.shape_cast %37 : vector<3x8x128xf32> to vector<1x3x8x128xf32>
      tpu.vector_store %arg4[%c0_30, %c0_31, %c0_32, %c0_33], %40 {strides = array<i32>} : memref<1x3x8x128xf32, #tpu.memory_space<vmem>>, vector<1x3x8x128xf32>,
    } else {
    }
    %c0 = arith.constant 0 : index
    %c0_1 = arith.constant 0 : index
    %3 = vector.load %arg2[%c0, %c0_1] : memref<16x128xf32, #tpu.memory_space<vmem>>, vector<16x128xf32>
    %c0_2 = arith.constant 0 : index
    %c0_3 = arith.constant 0 : index
    %4 = vector.load %arg3[%c0_2, %c0_3] : memref<16x128xf32, #tpu.memory_space<vmem>>, vector<16x128xf32>
    %5 = arith.negf %3 : vector<16x128xf32>
    %6 = math.exp %5 : vector<16x128xf32>
    %cst = arith.constant 1.000000e+00 : f32
    %7 = vector.broadcast %cst : f32 to vector<16x128xf32>
    %8 = arith.addf %7, %6 : vector<16x128xf32>
    %9 = arith.divf %7, %8 : vector<16x128xf32>
    %c0_4 = arith.constant 0 : index
    %c0_5 = arith.constant 0 : index
    %c0_6 = arith.constant 0 : index
    %c0_7 = arith.constant 0 : index
    %10 = vector.load %arg4[%c0_4, %c0_5, %c0_6, %c0_7] : memref<1x3x8x128xf32, #tpu.memory_space<vmem>>, vector<1x1x8x128xf32>
    %11 = vector.shape_cast %10 : vector<1x1x8x128xf32> to vector<8x128xf32>
    %12 = arith.mulf %9, %4 : vector<16x128xf32>
    %13 = vector.shape_cast %12 : vector<16x128xf32> to vector<2x8x128xf32>
    %cst_8 = arith.constant dense<0.000000e+00> : vector<8x128xf32>
    %14 = vector.multi_reduction <add>, %13, %cst_8 [0] : vector<2x8x128xf32> to vector<8x128xf32>
    %15 = arith.addf %11, %14 : vector<8x128xf32>
    %c0_9 = arith.constant 0 : index
    %c0_10 = arith.constant 0 : index
    %c0_11 = arith.constant 0 : index
    %c0_12 = arith.constant 0 : index
    %16 = vector.load %arg4[%c0_9, %c0_10, %c0_11, %c0_12] : memref<1x3x8x128xf32, #tpu.memory_space<vmem>>, vector<1x1x8x128xf32>
    %17 = vector.shape_cast %16 : vector<1x1x8x128xf32> to vector<8x128xf32>
    %18 = vector.shape_cast %15 : vector<8x128xf32> to vector<1x1x8x128xf32>
    tpu.vector_store %arg4[%c0_9, %c0_10, %c0_11, %c0_12], %18 {strides = array<i32>} : memref<1x3x8x128xf32, #tpu.memory_space<vmem>>, vector<1x1x8x128xf32>,
    %c0_13 = arith.constant 0 : index
    %c1 = arith.constant 1 : index
    %c0_14 = arith.constant 0 : index
    %c0_15 = arith.constant 0 : index
    %19 = vector.load %arg4[%c0_13, %c1, %c0_14, %c0_15] : memref<1x3x8x128xf32, #tpu.memory_space<vmem>>, vector<1x1x8x128xf32>
    %20 = vector.shape_cast %19 : vector<1x1x8x128xf32> to vector<8x128xf32>
    %21 = arith.mulf %4, %4 : vector<16x128xf32>
    %22 = vector.shape_cast %21 : vector<16x128xf32> to vector<2x8x128xf32>
    %cst_16 = arith.constant dense<0.000000e+00> : vector<8x128xf32>
    %23 = vector.multi_reduction <add>, %22, %cst_16 [0] : vector<2x8x128xf32> to vector<8x128xf32>
    %24 = arith.addf %20, %23 : vector<8x128xf32>
    %c0_17 = arith.constant 0 : index
    %c1_18 = arith.constant 1 : index
    %c0_19 = arith.constant 0 : index
    %c0_20 = arith.constant 0 : index
    %25 = vector.load %arg4[%c0_17, %c1_18, %c0_19, %c0_20] : memref<1x3x8x128xf32, #tpu.memory_space<vmem>>, vector<1x1x8x128xf32>
    %26 = vector.shape_cast %25 : vector<1x1x8x128xf32> to vector<8x128xf32>
    %27 = vector.shape_cast %24 : vector<8x128xf32> to vector<1x1x8x128xf32>
    tpu.vector_store %arg4[%c0_17, %c1_18, %c0_19, %c0_20], %27 {strides = array<i32>} : memref<1x3x8x128xf32, #tpu.memory_space<vmem>>, vector<1x1x8x128xf32>,
    %c0_21 = arith.constant 0 : index
    %c2 = arith.constant 2 : index
    %c0_22 = arith.constant 0 : index
    %c0_23 = arith.constant 0 : index
    %28 = vector.load %arg4[%c0_21, %c2, %c0_22, %c0_23] : memref<1x3x8x128xf32, #tpu.memory_space<vmem>>, vector<1x1x8x128xf32>
    %29 = vector.shape_cast %28 : vector<1x1x8x128xf32> to vector<8x128xf32>
    %30 = arith.mulf %9, %9 : vector<16x128xf32>
    %31 = vector.shape_cast %30 : vector<16x128xf32> to vector<2x8x128xf32>
    %cst_24 = arith.constant dense<0.000000e+00> : vector<8x128xf32>
    %32 = vector.multi_reduction <add>, %31, %cst_24 [0] : vector<2x8x128xf32> to vector<8x128xf32>
    %33 = arith.addf %29, %32 : vector<8x128xf32>
    %c0_25 = arith.constant 0 : index
    %c2_26 = arith.constant 2 : index
    %c0_27 = arith.constant 0 : index
    %c0_28 = arith.constant 0 : index
    %34 = vector.load %arg4[%c0_25, %c2_26, %c0_27, %c0_28] : memref<1x3x8x128xf32, #tpu.memory_space<vmem>>, vector<1x1x8x128xf32>
    %35 = vector.shape_cast %34 : vector<1x1x8x128xf32> to vector<8x128xf32>
    %36 = vector.shape_cast %33 : vector<8x128xf32> to vector<1x1x8x128xf32>
    tpu.vector_store %arg4[%c0_25, %c2_26, %c0_27, %c0_28], %36 {strides = array<i32>} : memref<1x3x8x128xf32, #tpu.memory_space<vmem>>, vector<1x1x8x128xf32>,
    return
  }
  func.func @transform_0(%arg0: i32, %arg1: i32) -> (i32, i32) {
    %c1_i32 = arith.constant 1 : i32
    %0 = arith.muli %arg0, %c1_i32 : i32
    %1 = arith.addi %0, %arg1 : i32
    %c0_i32 = arith.constant 0 : i32
    %c0_i32_0 = arith.constant 0 : i32
    return %1, %c0_i32 : i32, i32
  }
  func.func @transform_1(%arg0: i32, %arg1: i32) -> (i32, i32) {
    %c1_i32 = arith.constant 1 : i32
    %0 = arith.muli %arg0, %c1_i32 : i32
    %1 = arith.addi %0, %arg1 : i32
    %c0_i32 = arith.constant 0 : i32
    %c0_i32_0 = arith.constant 0 : i32
    return %1, %c0_i32 : i32, i32
  }
  func.func @transform_2(%arg0: i32, %arg1: i32) -> (i32, i32, i32, i32) {
    %c0_i32 = arith.constant 0 : i32
    %c0_i32_0 = arith.constant 0 : i32
    %c0_i32_1 = arith.constant 0 : i32
    %c0_i32_2 = arith.constant 0 : i32
    return %arg0, %c0_i32, %c0_i32_0, %c0_i32_1 : i32, i32, i32, i32
  }
}

</mosaic_0001>

<llo_original>
// kernel: dice_loss.1
$region0: #{dice_loss.1}
  #allocation0 [shape = 'u32[]', space=smem, size = 0x4, offset = 0x4, fixed_abs, tag = 'smem constant byte address 0x4 - core index']
  #allocation1 [shape = 'u32[72,128]{1,0:T(1,128)}', space=vmem, size = 0x9000, scoped, tag = 'internal scratch']
  %s0 = inlined_call_operand.vmem [shape: f32[16,128], index: 0, kind: input, shape index: {}]
  %s1 = inlined_call_operand.vmem [shape: f32[16,128], index: 1, kind: input, shape index: {}]
  %s2 = inlined_call_operand.vmem [shape: f32[1,3,8,128], index: 2, kind: output, shape index: {}]
  %s3 = sld [smem:[#allocation0]]
  $region22: #{dice_loss.1} parent=0
    _
  %s5 = ssub.s32 1, %s3
  %s6 = scalar_select 0, %s5, %s3
  // Predicated region
  $region2: #{dice_loss.1} parent=0 // pred_check
    _
  $region3: #{dice_loss.1} parent=0 // pred_check_branch
    %8 = sbr.rel (0) target = $region5
  $region4: #{dice_loss.1} parent=0 // pred_region
    %s9 = sadd.s32 0, 0
    %s10 = smul.u32 2, %s9
    %p11 = scmp.lt.s32.totalorder %s10, 1
    %s12 = scalar_select %p11, %s10, 1
    %s13 = smul.addr %s12, 8
    %s14 = scalar_lea.vmem %s0, %s13
    %s15 = sadd.s32 0, 0
    %s16 = smul.u32 2, %s15
  $region5: #{dice_loss.1} parent=0 // pred_fallthru
    _
  // Predicated region
  $region6: #{dice_loss.1} parent=0 // pred_check
    _
  $region7: #{dice_loss.1} parent=0 // pred_check_branch
    %18 = sbr.rel (0) target = $region9
  $region8: #{dice_loss.1} parent=0 // pred_region
    %s19 = sadd.s32 0, 0
    %s20 = smul.u32 2, %s19
    %p21 = scmp.lt.s32.totalorder %s20, 1
    %s22 = scalar_select %p21, %s20, 1
    %s23 = smul.addr %s22, 8
    %s24 = scalar_lea.vmem %s1, %s23
    %s25 = sadd.s32 0, 0
    %s26 = smul.u32 2, %s25
  $region9: #{dice_loss.1} parent=0 // pred_fallthru
    _
  %s27 = sadd.s32 0, 0
  %s28 = smul.u32 2, %s27
  %p29 = scmp.lt.s32.totalorder %s28, 1
  %s30 = scalar_select %p29, %s28, 1
  %s31 = smul.addr %s30, 8
  %s32 = scalar_lea.vmem %s0, %s31
  %s33 = sadd.s32 0, 0
  %s34 = smul.u32 2, %s33
  %p35 = scmp.lt.s32.totalorder %s34, 1
  %s36 = scalar_select %p35, %s34, 1
  %s37 = smul.addr %s36, 8
  %s38 = scalar_lea.vmem %s1, %s37
  %s39 = sadd.s32 0, 0
  %s40 = smul.u32 2, %s39
  %p41 = scmp.lt.s32.totalorder %s40, 1
  %s42 = scalar_select %p41, %s40, 1
  %s43 = smul.addr %s42, 8
  %s44 = scalar_lea.vmem %s0, %s43
  %s45 = sadd.s32 0, 0
  %s46 = smul.u32 2, %s45
  %s47 = sadd.s32 0, 0
  %s48 = smul.u32 2, %s47
  %p49 = scmp.lt.s32.totalorder %s48, 1
  %s50 = scalar_select %p49, %s48, 1
  %s51 = smul.addr %s50, 8
  %s52 = scalar_lea.vmem %s1, %s51
  %s53 = sadd.s32 0, 0
  %s54 = smul.u32 2, %s53
  %p55 = scmp.eq.s32.totalorder 0, 0
  // Predicated region
  $region10: #{dice_loss.1} parent=0 // pred_check
    %p56 = pneg %p55
  $region11: #{dice_loss.1} parent=0 // pred_check_branch
    %58 = sbr.rel (%p56) target = $region13
  $region12: #{dice_loss.1} parent=0 // pred_region
    %59 = vst [vmem:[%s2] sm:$0xff] 0.0
    %60 = vst [vmem:[%s2 + $0x8] sm:$0xff] 0.0
    %61 = vst [vmem:[%s2 + $0x10] sm:$0xff] 0.0
  $region13: #{dice_loss.1} parent=0 // pred_fallthru
    _
  %v62 = vld [vmem:[%s44] sm:$0xff]
  %v63 = vld [vmem:[%s44 + $0x8] sm:$0xff]
  %v64 = vld [vmem:[%s52] sm:$0xff]
  %v65 = vld [vmem:[%s52 + $0x8] sm:$0xff]
  %v66 = vxor.u32 %v62, 2147483648
  %v67 = vxor.u32 %v63, 2147483648
  %v68 = vmul.f32 %v66, 1.442695
  %v69 = vpow.pop %v68
  %v70 = vmul.f32 %v67, 1.442695
  %v71 = vpow.pop %v70
  %v72 = vadd.f32 %v69, 1.0
  %v73 = vadd.f32 %v71, 1.0
  %v74 = vrcp.pop %v72
  %v75 = vmul.f32 %v72, %v74
  %v76 = vsub.f32 1.0, %v75
  %v77 = vmul.f32 %v74, %v76
  %v78 = vadd.f32 %v74, %v77
  %vm79 = vweird.f32 %v72
  %vm80 = vweird.f32 %v74
  %vm81 = vmor %vm79, %vm80
  %v82 = vsel %vm81, %v74, %v78
  %v83 = vand.u32 2147483647, %v72
  %vm84 = vcmp.eq.f32.partialorder %v83, 8.507059e+37
  %v85 = vand.u32 %v72, 2147483648
  %v86 = vor.u32 1.1754944e-38, %v85
  %v87 = vsel %vm84, %v86, %v82
  %v88 = vmul.f32 1.0, %v87
  %v89 = vrcp.pop %v73
  %v90 = vmul.f32 %v73, %v89
  %v91 = vsub.f32 1.0, %v90
  %v92 = vmul.f32 %v89, %v91
  %v93 = vadd.f32 %v89, %v92
  %vm94 = vweird.f32 %v73
  %vm95 = vweird.f32 %v89
  %vm96 = vmor %vm94, %vm95
  %v97 = vsel %vm96, %v89, %v93
  %v98 = vand.u32 2147483647, %v73
  %vm99 = vcmp.eq.f32.partialorder %v98, 8.507059e+37
  %v100 = vand.u32 %v73, 2147483648
  %v101 = vor.u32 1.1754944e-38, %v100
  %v102 = vsel %vm99, %v101, %v97
  %v103 = vmul.f32 1.0, %v102
  %v104 = vld [vmem:[%s2] sm:$0xff]
  %v105 = vmul.f32 %v88, %v64
  %v106 = vmul.f32 %v103, %v65
  %v107 = vadd.f32 %v105, %v106
  %v108 = vadd.f32 %v104, %v107
  %109 = vst [vmem:[%s2] sm:$0xff] %v108
  %s110 = scalar_lea.vmem %s2, 8
  %v111 = vld [vmem:[%s110] sm:$0xff]
  %v112 = vmul.f32 %v64, %v64
  %v113 = vmul.f32 %v65, %v65
  %v114 = vadd.f32 %v112, %v113
  %v115 = vadd.f32 %v111, %v114
  %116 = vst [vmem:[%s110] sm:$0xff] %v115
  %s117 = scalar_lea.vmem %s2, 16
  %v118 = vld [vmem:[%s117] sm:$0xff]
  %v119 = vmul.f32 %v88, %v88
  %v120 = vmul.f32 %v103, %v103
  %v121 = vadd.f32 %v119, %v120
  %v122 = vadd.f32 %v118, %v121
  %123 = vst [vmem:[%s117] sm:$0xff] %v122
  // Predicated region
  $region14: #{dice_loss.1} parent=0 // pred_check
    _
  $region15: #{dice_loss.1} parent=0 // pred_check_branch
    %125 = sbr.rel (0) target = $region17
  $region16: #{dice_loss.1} parent=0 // pred_region
    _
  $region17: #{dice_loss.1} parent=0 // pred_fallthru
    _
  // Predicated region
  $region18: #{dice_loss.1} parent=0 // pred_check
    _
  $region19: #{dice_loss.1} parent=0 // pred_check_branch
    %127 = sbr.rel (0) target = $region21
  $region20: #{dice_loss.1} parent=0 // pred_region
    _
  $region21: #{dice_loss.1} parent=0 // pred_fallthru
    _

</llo_original>
